<compile_context>
chip_gen: v7x
topology: tpu7x:2x2x1
jax: 0.10.0
libtpu: 0.0.40
codegen_flags: <defaults>
</compile_context>

<pallas_src>
import functools

import jax
import jax.numpy as jnp
from jax.experimental import pallas as pl
from jax.experimental.pallas import tpu as pltpu


def _round_up(x, m):
    return ((x + m - 1) // m) * m


def _adaptive_embedding_kernel(inp_ref, w_ref, out_ref, *, cluster_meta, v_total_pad):
    """One fused matmul: onehot(token -> concatenated-table row) @ W_eff.

    cluster_meta: static tuple of (l_idx, r_idx, row_offset) per cluster.
    Tokens outside every cluster (incl. padding token -1) give a zero one-hot
    row -> zero output row, so the reference's masked index_copy_ scatter is a
    plain matmul with the concatenated fused table.
    """
    tn = out_ref.shape[0]
    tok = inp_ref[...]                                   # [TN, 1] int32

    # Map token -> row index in the concatenated fused table (-1 => zero row).
    eff = jnp.full_like(tok, -1)
    for (l_idx, r_idx, row_off) in cluster_meta:
        in_cluster = (tok >= l_idx) & (tok < r_idx)
        eff = jnp.where(in_cluster, tok - l_idx + row_off, eff)

    # Exact gather through the MXU: bf16 {0,1} one-hot selector (single iota,
    # built once per tile).
    col = jax.lax.broadcasted_iota(jnp.int32, (tn, v_total_pad), 1)
    onehot = (col == eff).astype(jnp.bfloat16)           # [TN, V_total_pad]

    out_ref[...] = jnp.dot(onehot, w_ref[...],
                           preferred_element_type=jnp.float32)  # [TN, dp_pad] f32


def prepare_adaptive_embedding_params(emb_weights, proj_weights, cutoffs, n_token,
                                      d_proj, div_val):
    """One-time parameter prep (fuse projection + emb_scale, concat, pad, bf16).

    emb_weights : list of [V_i, d_emb_i] f32 embedding tables.
    proj_weights: list of [d_proj, d_emb_i] f32 projections (None => no proj,
                  only legal when d_emb_i == d_proj).
    Returns (fused_table_bf16, cluster_meta, dp_pad, v_total_pad).
    """
    dp_pad = _round_up(d_proj, 128)
    emb_scale = float(d_proj) ** 0.5
    if div_val == 1:
        cutoff_ends = [0, n_token]
    else:
        cutoff_ends = [0] + list(cutoffs) + [n_token]

    blocks, meta = [], []
    row_off = 0
    for i in range(len(cutoff_ends) - 1):
        l, r = cutoff_ends[i], cutoff_ends[i + 1]
        w = jnp.asarray(emb_weights[i], jnp.float32)      # [r-l, d_emb_i]
        v, e = w.shape
        assert v == r - l, "embedding table size must match cluster size"
        p = proj_weights[i]
        if p is not None:
            w_eff = w @ jnp.asarray(p, jnp.float32).T     # [v, d_proj]
        else:
            assert e == d_proj, "no projection requires d_embed == d_proj"
            w_eff = w
        w_eff = w_eff * emb_scale                         # fold emb_scale in too
        blk = jnp.zeros((v, dp_pad), jnp.float32).at[:, :d_proj].set(w_eff)
        blocks.append(blk)
        meta.append((l, r, row_off))
        row_off += v

    v_total = row_off
    v_total_pad = _round_up(v_total, 128)
    table = jnp.concatenate(blocks, axis=0)
    if v_total_pad > v_total:
        table = jnp.pad(table, ((0, v_total_pad - v_total), (0, 0)))
    return table.astype(jnp.bfloat16), tuple(meta), dp_pad, v_total_pad


@functools.partial(jax.jit,
                   static_argnames=("cluster_meta", "dp_pad", "v_total_pad",
                                    "d_proj", "row_tile"))
def adaptive_embedding(inp, fused_table, *, cluster_meta, dp_pad, v_total_pad,
                       d_proj, row_tile=256):
    """inp: int array of any shape -> f32 array of shape inp.shape + (d_proj,)."""
    orig_shape = inp.shape
    flat = inp.reshape(-1).astype(jnp.int32)
    n = flat.shape[0]

    # v7x has 2 TensorCores: pick tn so the parallel grid axis has >= 2 steps
    # whenever there is enough work; otherwise the second core idles.
    tn = max(8, min(row_tile, _round_up(pl.cdiv(n, 2), 8)))
    n_blocks = pl.cdiv(n, tn)
    n_pad = tn * n_blocks
    # Padding uses token -1 (outside every cluster) -> zero rows, sliced off.
    flat = jnp.pad(flat, (0, n_pad - n), constant_values=-1)
    tok2d = flat[:, None]                                 # [n_pad, 1]

    kernel = functools.partial(_adaptive_embedding_kernel,
                               cluster_meta=cluster_meta,
                               v_total_pad=v_total_pad)

    # VMEM budget: single-buffered fused table + double-buffered token/output
    # blocks + one-hot intermediate + headroom; cap at 56 MiB (fits v7x's
    # 64 MiB per-TC VMEM, plenty for v5e/v6e at these sizes).
    w_bytes = v_total_pad * dp_pad * 2                    # bf16, Buffered(1)
    tok_bytes = 2 * tn * 128 * 4                          # (tn,1) int32, lane-padded
    out_bytes = 2 * tn * dp_pad * 4                       # f32 output blocks
    onehot_bytes = tn * v_total_pad * 2                   # bf16 intermediate
    vmem_limit = w_bytes + tok_bytes + out_bytes + onehot_bytes + (8 << 20)
    vmem_limit = int(min(max(vmem_limit, 16 << 20), 56 << 20))

    out = pl.pallas_call(
        kernel,
        out_shape=jax.ShapeDtypeStruct((n_pad, dp_pad), jnp.float32),
        grid=(n_blocks,),
        in_specs=[
            pl.BlockSpec((tn, 1), lambda i: (i, 0)),                  # tokens
            # Grid-invariant fused table: single-buffer (no point double-
            # buffering a block whose index never changes).
            pl.BlockSpec((v_total_pad, dp_pad), lambda i: (0, 0),
                         pipeline_mode=pl.Buffered(1)),
        ],
        out_specs=pl.BlockSpec((tn, dp_pad), lambda i: (i, 0)),        # lane-dense
        compiler_params=pltpu.CompilerParams(
            dimension_semantics=("parallel",),
            vmem_limit_bytes=vmem_limit),
    )(tok2d, fused_table)

    out = out[:n, :d_proj]
    return out.reshape(*orig_shape, d_proj)


# ---------------- pure-JAX references ----------------
def reference_adaptive_embedding(inp, emb_weights, proj_weights, cutoffs, n_token,
                                 d_embed, d_proj, div_val):
    """Full-precision (f32) mirror of the PyTorch forward."""
    emb_scale = d_proj ** 0.5
    if div_val == 1:
        embed = jnp.take(emb_weights[0], inp, axis=0)
        if proj_weights[0] is not None:
            embed = embed @ proj_weights[0].T
    else:
        cutoff_ends = [0] + list(cutoffs) + [n_token]
        flat = inp.reshape(-1)
        emb_flat = jnp.zeros((flat.shape[0], d_proj), jnp.float32)
        for i in range(len(cutoff_ends) - 1):
            l, r = cutoff_ends[i], cutoff_ends[i + 1]
            mask = (flat >= l) & (flat < r)
            idx = jnp.clip(flat - l, 0, r - l - 1)
            emb_i = jnp.take(emb_weights[i], idx, axis=0) @ proj_weights[i].T
            emb_flat = jnp.where(mask[:, None], emb_i, emb_flat)
        embed = emb_flat.reshape(*inp.shape, d_proj)
    return embed * emb_scale


def reference_from_fused_table(inp, fused_table_bf16, cluster_meta, d_proj):
    """Tight reference: gather from the same bf16 fused table the kernel uses
    (the one-hot MXU gather should reproduce these values exactly)."""
    tbl = fused_table_bf16.astype(jnp.float32)
    flat = inp.reshape(-1)
    eff = jnp.full(flat.shape, -1, jnp.int32)
    for (l, r, off) in cluster_meta:
        eff = jnp.where((flat >= l) & (flat < r), flat - l + off, eff)
    rows = jnp.take(tbl, jnp.clip(eff, 0, tbl.shape[0] - 1), axis=0)
    rows = jnp.where(eff[:, None] >= 0, rows, 0.0)
    return rows[:, :d_proj].reshape(*inp.shape, d_proj)


if __name__ == "__main__":
    key = jax.random.PRNGKey(0)

    n_token, d_proj = 384, 128
    cutoffs = [128, 256]
    seq_len, bsz = 8, 64            # 512 tokens -> 2 parallel grid steps of 256 rows
    k_inp, k_rest = jax.random.split(key)
    inp = jax.random.randint(k_inp, (seq_len, bsz), 0, n_token, dtype=jnp.int32)

    def run_and_check(name, emb_w, proj_w, div_val, d_embed):
        table, meta, dp_pad, v_pad = prepare_adaptive_embedding_params(
            emb_w, proj_w, cutoffs, n_token, d_proj, div_val=div_val)
        out = adaptive_embedding(inp, table, cluster_meta=meta, dp_pad=dp_pad,
                                 v_total_pad=v_pad, d_proj=d_proj)
        jax.block_until_ready(out)
        assert out.shape == (seq_len, bsz, d_proj)
        # Tight: kernel gather must match the bf16 fused table it was given.
        ref_tight = reference_from_fused_table(inp, table, meta, d_proj)
        assert jnp.allclose(out, ref_tight, rtol=1e-6, atol=1e-6), (
            f"{name} tight max abs diff: {jnp.max(jnp.abs(out - ref_tight))}")
        # Loose: matches the f32 PyTorch-mirror reference up to bf16 rounding.
        ref_f32 = reference_adaptive_embedding(inp, emb_w, proj_w, cutoffs,
                                               n_token, d_embed, d_proj, div_val)
        assert jnp.allclose(out, ref_f32, rtol=1e-2, atol=1e-2), (
            f"{name} loose max abs diff: {jnp.max(jnp.abs(out - ref_f32))}")

    # ---- config A: div_val = 1, d_proj != d_embed (single table + projection) ----
    d_embed_a = 64
    ka, kb, kc, kd = jax.random.split(k_rest, 4)
    emb_a = [0.1 * jax.random.normal(ka, (n_token, d_embed_a), jnp.float32)]
    proj_a = [0.05 * jax.random.normal(kb, (d_proj, d_embed_a), jnp.float32)]
    run_and_check("div_val=1+proj", emb_a, proj_a, div_val=1, d_embed=d_embed_a)

    # ---- config B: div_val = 2 (adaptive tables + per-cluster projections) ----
    d_embed_b = 128
    div_val = 2
    cutoff_ends = [0] + cutoffs + [n_token]
    n_layers = len(cutoff_ends) - 1
    keys = jax.random.split(kc, 2 * n_layers)
    emb_b, proj_b = [], []
    for i in range(n_layers):
        l, r = cutoff_ends[i], cutoff_ends[i + 1]
        d_emb_i = d_embed_b // (div_val ** i)
        emb_b.append(0.1 * jax.random.normal(keys[2 * i], (r - l, d_emb_i), jnp.float32))
        proj_b.append(0.05 * jax.random.normal(keys[2 * i + 1], (d_proj, d_emb_i),
                                               jnp.float32))
    run_and_check("div_val=2", emb_b, proj_b, div_val=div_val, d_embed=d_embed_b)

    # ---- config C: div_val = 1, d_proj == d_embed (no projection) ----
    emb_c = [0.1 * jax.random.normal(kd, (n_token, d_proj), jnp.float32)]
    run_and_check("div_val=1 no-proj", emb_c, [None], div_val=1, d_embed=d_proj)

    print("KERNEL_OK")
</pallas_src>

<mosaic_0001>
module attributes {stable_mosaic.version = 11 : i64} {
  func.func @_adaptive_embedding_kernel(%arg0: i32, %arg1: memref<256x1xi32, #tpu.memory_space<vmem>>, %arg2: memref<384x128xbf16, #tpu.memory_space<vmem>>, %arg3: memref<256x128xf32, #tpu.memory_space<vmem>>) attributes {dimension_semantics = [#tpu.dimension_semantics<parallel>], iteration_bounds = array<i64: 2>, scalar_prefetch = 0 : i64, scratch_operands = 0 : i64, tpu.core_type = #tpu.core_type<tc>, window_params = [{transform_indices = @transform_0, window_bounds = array<i64: 256, 1>}, {pipeline_mode = #tpu.pipeline_mode<synchronous>, transform_indices = @transform_1, window_bounds = array<i64: 384, 128>}, {transform_indices = @transform_2, window_bounds = array<i64: 256, 128>}]} {
    %c0 = arith.constant 0 : index
    %c0_0 = arith.constant 0 : index
    %0 = vector.load %arg1[%c0, %c0_0] : memref<256x1xi32, #tpu.memory_space<vmem>>, vector<256x1xi32>
    %c-1_i32 = arith.constant -1 : i32
    %1 = vector.broadcast %c-1_i32 : i32 to vector<256x1xi32>
    %c0_i32 = arith.constant 0 : i32
    %2 = vector.broadcast %c0_i32 : i32 to vector<256x1xi32>
    %3 = arith.cmpi sge, %0, %2 : vector<256x1xi32>
    %c384_i32 = arith.constant 384 : i32
    %4 = vector.broadcast %c384_i32 : i32 to vector<256x1xi32>
    %5 = arith.cmpi slt, %0, %4 : vector<256x1xi32>
    %6 = arith.andi %3, %5 : vector<256x1xi1>
    %c0_i32_1 = arith.constant 0 : i32
    %7 = vector.broadcast %c0_i32_1 : i32 to vector<256x1xi32>
    %8 = arith.subi %0, %7 : vector<256x1xi32>
    %c0_i32_2 = arith.constant 0 : i32
    %9 = vector.broadcast %c0_i32_2 : i32 to vector<256x1xi32>
    %10 = arith.addi %8, %9 : vector<256x1xi32>
    %11 = arith.select %6, %10, %1 : vector<256x1xi1>, vector<256x1xi32>
    %12 = tpu.iota {dimensions = array<i32: 1>} : vector<256x384xi32>
    %13 = vector.broadcast %11 : vector<256x1xi32> to vector<256x384xi32>
    %14 = arith.cmpi eq, %12, %13 : vector<256x384xi32>
    %15 = arith.extui %14 : vector<256x384xi1> to vector<256x384xi32>
    %16 = arith.sitofp %15 : vector<256x384xi32> to vector<256x384xf32>
    %17 = arith.truncf %16 : vector<256x384xf32> to vector<256x384xbf16>
    %c0_3 = arith.constant 0 : index
    %c0_4 = arith.constant 0 : index
    %18 = vector.load %arg2[%c0_3, %c0_4] : memref<384x128xbf16, #tpu.memory_space<vmem>>, vector<384x128xbf16>
    %cst = arith.constant dense<0.000000e+00> : vector<256x128xf32>
    %19 = tpu.matmul %17, %18, %cst {dimension_numbers = #tpu.dot_dimension_numbers<[1], [0], [0], [1], [0, 0, 1, 1], [], []>} : vector<256x384xbf16>, vector<384x128xbf16>, vector<256x128xf32> -> vector<256x128xf32>
    %c0_5 = arith.constant 0 : index
    %c0_6 = arith.constant 0 : index
    %20 = vector.load %arg3[%c0_5, %c0_6] : memref<256x128xf32, #tpu.memory_space<vmem>>, vector<256x128xf32>
    tpu.vector_store %arg3[%c0_5, %c0_6], %19 {strides = array<i32>} : memref<256x128xf32, #tpu.memory_space<vmem>>, vector<256x128xf32>,
    return
  }
  func.func @transform_0(%arg0: i32) -> (i32, i32) {
    %c0_i32 = arith.constant 0 : i32
    %c0_i32_0 = arith.constant 0 : i32
    return %arg0, %c0_i32 : i32, i32
  }
  func.func @transform_1(%arg0: i32) -> (i32, i32) {
    %c0_i32 = arith.constant 0 : i32
    %c0_i32_0 = arith.constant 0 : i32
    %c0_i32_1 = arith.constant 0 : i32
    return %c0_i32, %c0_i32_0 : i32, i32
  }
  func.func @transform_2(%arg0: i32) -> (i32, i32) {
    %c0_i32 = arith.constant 0 : i32
    %c0_i32_0 = arith.constant 0 : i32
    return %arg0, %c0_i32 : i32, i32
  }
}

</mosaic_0001>

<llo_original>
// kernel: adaptive_embedding.1
$region0: #{adaptive_embedding.1}
  #allocation0 [shape = 'u32[]', space=smem, size = 0x4, offset = 0x4, fixed_abs, tag = 'smem constant byte address 0x4 - core index']
  #allocation1 [shape = 'u32[144,128]{1,0:T(1,128)}', space=vmem, size = 0x12000, scoped, tag = 'internal scratch']
  %s0 = inlined_call_operand.vmem [shape: s32[512,1], index: 0, kind: input, shape index: {}]
  %s1 = inlined_call_operand.vmem [shape: bf16[384,128], index: 1, kind: input, shape index: {}]
  %s2 = inlined_call_operand.hbm [shape: f32[512,128], index: 2, kind: output, shape index: {}]
  %s3 = sld [smem:[#allocation0]]
  $region41: #{adaptive_embedding.1} parent=0
    _
  %s5 = ssub.s32 1, %s3
  %s6 = scalar_select 0, %s5, %s3
  $region1: #{adaptive_embedding.1} parent=0
    #allocation2 [shape = 'u8[262144]{0}', space=vmem, size = 0x40000, scoped, tag = 'output window, operand 0']
    #allocation3 [shape = 's32[2]{0}', space=sflag, size = 0x8, scoped, tag = 'scoped memory for adaptive_embedding.1']
    %7 = vsyncpa [#allocation3], 0
    %s8 = scalar_lea.sflag [#allocation3], 1
    %9 = vsyncpa %s8, 0
    loop: start=0, step=1, limit=4
    $region2: #{adaptive_embedding.1} parent=1 // loop_pre_header
      _
    $region3: #{adaptive_embedding.1} parent=1 // loop_header
      %s11 = sphi 0, %s15
      %p12 = scmp.ge.s32.totalorder %s11, 4
      %s21 = sphi 0, %s23
      %s24 = sphi 0, %s21
      %s25 = sphi 0, %s24
      %s41 = sphi 0, %s25
      %s45 = sphi 0, %s45
      %s47 = sphi 0, %s45
      %s48 = sphi 0, %s47
      %s62 = sphi 0, %s48
      %s68 = sphi 0, %s70
      %s71 = sphi 0, %s68
      %s72 = sphi 0, %s71
      %s88 = sphi 0, %s72
    $region4: #{adaptive_embedding.1} parent=1 // loop_header_branch
      %14 = sbr.rel (%p12) target = $region8
    $region5: #{adaptive_embedding.1} parent=1 // loop_body
      %s16 = ssub.s32 %s11, 1
      %s17 = ssub.s32 %s11, 2
      %s18 = sadd.s32 %s11, 1
      %s19 = ssub.s32 %s11, %s18
      %p20 = scmp.eq.s32.totalorder %s19, 0
      %s22 = sadd.s32 %s21, 1
      %s23 = scalar_select %p20, %s21, %s22
      %p26 = pneg %p20
      %p27 = scmp.eq.s32.totalorder %s11, 1
      %p28 = por %p26, %p27
      %p29 = scmp.ne.s32.totalorder %s21, %s24
      %p30 = scmp.eq.s32.totalorder %s11, 0
      %p31 = por %p29, %p30
      %p32 = scmp.ne.s32.totalorder %s21, %s24
      %p33 = scmp.eq.s32.totalorder %s16, 1
      %p34 = por %p32, %p33
      %p35 = scmp.ne.s32.totalorder %s24, %s25
      %p36 = scmp.eq.s32.totalorder %s16, 0
      %p37 = por %p35, %p36
      %p38 = scmp.ne.s32.totalorder %s24, %s25
      %p39 = scmp.eq.s32.totalorder %s17, 1
      %p40 = por %p38, %p39
      %p42 = scmp.ne.s32.totalorder %s25, %s41
      %p43 = scmp.eq.s32.totalorder %s17, 0
      %p44 = por %p42, %p43
      %s46 = sadd.s32 %s45, 1
      %p49 = scmp.eq.s32.totalorder %s11, 1
      %p50 = scmp.ne.s32.totalorder %s45, %s47
      %p51 = scmp.eq.s32.totalorder %s11, 0
      %p52 = por %p50, %p51
      %p53 = scmp.ne.s32.totalorder %s45, %s47
      %p54 = scmp.eq.s32.totalorder %s16, 1
      %p55 = por %p53, %p54
      %p56 = scmp.ne.s32.totalorder %s47, %s48
      %p57 = scmp.eq.s32.totalorder %s16, 0
      %p58 = por %p56, %p57
      %p59 = scmp.ne.s32.totalorder %s47, %s48
      %p60 = scmp.eq.s32.totalorder %s17, 1
      %p61 = por %p59, %p60
      %p63 = scmp.ne.s32.totalorder %s48, %s62
      %p64 = scmp.eq.s32.totalorder %s17, 0
      %p65 = por %p63, %p64
      %s66 = ssub.s32 %s11, %s18
      %p67 = scmp.eq.s32.totalorder %s66, 0
      %s69 = sadd.s32 %s68, 1
      %s70 = scalar_select %p67, %s68, %s69
      %p73 = pneg %p67
      %p74 = scmp.eq.s32.totalorder %s11, 1
      %p75 = por %p73, %p74
      %p76 = scmp.ne.s32.totalorder %s68, %s71
      %p77 = scmp.eq.s32.totalorder %s11, 0
      %p78 = por %p76, %p77
      %p79 = scmp.ne.s32.totalorder %s68, %s71
      %p80 = scmp.eq.s32.totalorder %s16, 1
      %p81 = por %p79, %p80
      %p82 = scmp.ne.s32.totalorder %s71, %s72
      %p83 = scmp.eq.s32.totalorder %s16, 0
      %p84 = por %p82, %p83
      %p85 = scmp.ne.s32.totalorder %s71, %s72
      %p86 = scmp.eq.s32.totalorder %s17, 1
      %p87 = por %p85, %p86
      %p89 = scmp.ne.s32.totalorder %s72, %s88
      %p90 = scmp.eq.s32.totalorder %s17, 0
      %p91 = por %p89, %p90
      %p92 = scmp.le.s32.totalorder 1, %s11
      %p93 = scmp.lt.s32.totalorder %s11, 3
      %p94 = pnand %p92, %p93
      %p95 = pneg %p94
      // Predicated region
      $region9: #{adaptive_embedding.1} parent=5 // pred_check
        _
      $region10: #{adaptive_embedding.1} parent=5 // pred_check_branch
        %97 = sbr.rel (%p94) target = $region12
      $region11: #{adaptive_embedding.1} parent=5 // pred_region
        %s98 = ssub.s32 %s11, 1
        // Predicated region
        $region13: #{adaptive_embedding.1} parent=11 // pred_check
          %p99 = pneg %p58
        $region14: #{adaptive_embedding.1} parent=11 // pred_check_branch
          %101 = sbr.rel (%p99) target = $region16
        $region15: #{adaptive_embedding.1} parent=11 // pred_region
          _
        $region16: #{adaptive_embedding.1} parent=11 // pred_fallthru
          _
      $region12: #{adaptive_embedding.1} parent=5 // pred_fallthru
        _
      %p102 = scmp.lt.s32.totalorder %s11, 2
      // Predicated region
      $region17: #{adaptive_embedding.1} parent=5 // pred_check
        %p103 = pneg %p102
      $region18: #{adaptive_embedding.1} parent=5 // pred_check_branch
        %105 = sbr.rel (%p103) target = $region20
      $region19: #{adaptive_embedding.1} parent=5 // pred_region
        // Predicated region
        $region21: #{adaptive_embedding.1} parent=19 // pred_check
          %p106 = pneg %p31
        $region22: #{adaptive_embedding.1} parent=19 // pred_check_branch
          %108 = sbr.rel (%p106) target = $region24
        $region23: #{adaptive_embedding.1} parent=19 // pred_region
          %s109 = smul.u32 32, %s11
          %p110 = scmp.lt.s32.totalorder %s109, 63
          %s111 = scalar_select %p110, %s109, 63
          %s112 = smul.addr %s111, 8
          %s113 = scalar_lea.vmem %s0, %s112
          %s114 = smul.u32 32, %s11
        $region24: #{adaptive_embedding.1} parent=19 // pred_fallthru
          _
      $region20: #{adaptive_embedding.1} parent=5 // pred_fallthru
        _
      %p115 = scmp.le.s32.totalorder 1, %s11
      %p116 = scmp.lt.s32.totalorder %s11, 3
      %p117 = pnand %p115, %p116
      %p118 = pneg %p117
      // Predicated region
      $region25: #{adaptive_embedding.1} parent=5 // pred_check
        _
      $region26: #{adaptive_embedding.1} parent=5 // pred_check_branch
        %120 = sbr.rel (%p117) target = $region28
      $region27: #{adaptive_embedding.1} parent=5 // pred_region
        %s121 = ssub.s32 %s11, 1
        %s122 = smul.u32 32, %s16
        %p123 = scmp.lt.s32.totalorder %s122, 63
        %s124 = scalar_select %p123, %s122, 63
        %s125 = smul.addr %s124, 8
        %s126 = scalar_lea.vmem %s0, %s125
        %p127 = pneg %p37
        %p128 = pneg %p34
        %p129 = pneg %p58
        %p130 = pneg %p55
        %p131 = pneg %p84
        %p132 = pneg %p81
        %s133 = sand.u32 %s71, 1
        %s134 = scalar_lea.sflag [#allocation3], %s133
        %s135 = sand.u32 %s71, 1
        %s136 = smul.addr %s135, 256
        %s137 = scalar_lea.vmem [#allocation2], %s136
        %s138 = smul.u32 32, %s16
        %p139 = scmp.lt.s32.totalorder %s138, 63
        %s140 = scalar_select %p139, %s138, 63
        %s141 = smul.addr %s140, 8
        %s142 = scalar_lea.vmem %s0, %s141
        %s143 = smul.u32 32, %s16
        %s144 = smul.u32 32, %s16
        %v146 = vld [vmem:[%s142] sm:$0xff]
        %v147 = vld [vmem:[%s142 + $0x8] sm:$0xff]
        %v148 = vld [vmem:[%s142 + $0x10] sm:$0xff]
        %v149 = vld [vmem:[%s142 + $0x18] sm:$0xff]
        %v150 = vld [vmem:[%s142 + $0x20] sm:$0xff]
        %v151 = vld [vmem:[%s142 + $0x28] sm:$0xff]
        %v152 = vld [vmem:[%s142 + $0x30] sm:$0xff]
        %v153 = vld [vmem:[%s142 + $0x38] sm:$0xff]
        %v154 = vld [vmem:[%s142 + $0x40] sm:$0xff]
        %v155 = vld [vmem:[%s142 + $0x48] sm:$0xff]
        %v156 = vld [vmem:[%s142 + $0x50] sm:$0xff]
        %v157 = vld [vmem:[%s142 + $0x58] sm:$0xff]
        %v158 = vld [vmem:[%s142 + $0x60] sm:$0xff]
        %v159 = vld [vmem:[%s142 + $0x68] sm:$0xff]
        %v160 = vld [vmem:[%s142 + $0x70] sm:$0xff]
        %v161 = vld [vmem:[%s142 + $0x78] sm:$0xff]
        %v162 = vld [vmem:[%s142 + $0x80] sm:$0xff]
        %v163 = vld [vmem:[%s142 + $0x88] sm:$0xff]
        %v164 = vld [vmem:[%s142 + $0x90] sm:$0xff]
        %v165 = vld [vmem:[%s142 + $0x98] sm:$0xff]
        %v166 = vld [vmem:[%s142 + $0xa0] sm:$0xff]
        %v167 = vld [vmem:[%s142 + $0xa8] sm:$0xff]
        %v168 = vld [vmem:[%s142 + $0xb0] sm:$0xff]
        %v169 = vld [vmem:[%s142 + $0xb8] sm:$0xff]
        %v170 = vld [vmem:[%s142 + $0xc0] sm:$0xff]
        %v171 = vld [vmem:[%s142 + $0xc8] sm:$0xff]
        %v172 = vld [vmem:[%s142 + $0xd0] sm:$0xff]
        %v173 = vld [vmem:[%s142 + $0xd8] sm:$0xff]
        %v174 = vld [vmem:[%s142 + $0xe0] sm:$0xff]
        %v175 = vld [vmem:[%s142 + $0xe8] sm:$0xff]
        %v176 = vld [vmem:[%s142 + $0xf0] sm:$0xff]
        %v177 = vld [vmem:[%s142 + $0xf8] sm:$0xff]
        %vm178 = vcmp.ge.s32.totalorder %v146, 0
        %vm179 = vcmp.ge.s32.totalorder %v147, 0
        %vm180 = vcmp.ge.s32.totalorder %v148, 0
        %vm181 = vcmp.ge.s32.totalorder %v149, 0
        %vm182 = vcmp.ge.s32.totalorder %v150, 0
        %vm183 = vcmp.ge.s32.totalorder %v151, 0
        %vm184 = vcmp.ge.s32.totalorder %v152, 0
        %vm185 = vcmp.ge.s32.totalorder %v153, 0
        %vm186 = vcmp.ge.s32.totalorder %v154, 0
        %vm187 = vcmp.ge.s32.totalorder %v155, 0
        %vm188 = vcmp.ge.s32.totalorder %v156, 0
        %vm189 = vcmp.ge.s32.totalorder %v157, 0
        %vm190 = vcmp.ge.s32.totalorder %v158, 0
        %vm191 = vcmp.ge.s32.totalorder %v159, 0
        %vm192 = vcmp.ge.s32.totalorder %v160, 0
        %vm193 = vcmp.ge.s32.totalorder %v161, 0
        %vm194 = vcmp.ge.s32.totalorder %v162, 0
        %vm195 = vcmp.ge.s32.totalorder %v163, 0
        %vm196 = vcmp.ge.s32.totalorder %v164, 0
        %vm197 = vcmp.ge.s32.totalorder %v165, 0
        %vm198 = vcmp.ge.s32.totalorder %v166, 0
        %vm199 = vcmp.ge.s32.totalorder %v167, 0
        %vm200 = vcmp.ge.s32.totalorder %v168, 0
        %vm201 = vcmp.ge.s32.totalorder %v169, 0
        %vm202 = vcmp.ge.s32.totalorder %v170, 0
        %vm203 = vcmp.ge.s32.totalorder %v171, 0
        %vm204 = vcmp.ge.s32.totalorder %v172, 0
        %vm205 = vcmp.ge.s32.totalorder %v173, 0
        %vm206 = vcmp.ge.s32.totalorder %v174, 0
        %vm207 = vcmp.ge.s32.totalorder %v175, 0
        %vm208 = vcmp.ge.s32.totalorder %v176, 0
        %vm209 = vcmp.ge.s32.totalorder %v177, 0
        %vm210 = vcmp.lt.s32.totalorder %v146, 384
        %vm211 = vcmp.lt.s32.totalorder %v147, 384
        %vm212 = vcmp.lt.s32.totalorder %v148, 384
        %vm213 = vcmp.lt.s32.totalorder %v149, 384
        %vm214 = vcmp.lt.s32.totalorder %v150, 384
        %vm215 = vcmp.lt.s32.totalorder %v151, 384
        %vm216 = vcmp.lt.s32.totalorder %v152, 384
        %vm217 = vcmp.lt.s32.totalorder %v153, 384
        %vm218 = vcmp.lt.s32.totalorder %v154, 384
        %vm219 = vcmp.lt.s32.totalorder %v155, 384
        %vm220 = vcmp.lt.s32.totalorder %v156, 384
        %vm221 = vcmp.lt.s32.totalorder %v157, 384
        %vm222 = vcmp.lt.s32.totalorder %v158, 384
        %vm223 = vcmp.lt.s32.totalorder %v159, 384
        %vm224 = vcmp.lt.s32.totalorder %v160, 384
        %vm225 = vcmp.lt.s32.totalorder %v161, 384
        %vm226 = vcmp.lt.s32.totalorder %v162, 384
        %vm227 = vcmp.lt.s32.totalorder %v163, 384
        %vm228 = vcmp.lt.s32.totalorder %v164, 384
        %vm229 = vcmp.lt.s32.totalorder %v165, 384
        %vm230 = vcmp.lt.s32.totalorder %v166, 384
        %vm231 = vcmp.lt.s32.totalorder %v167, 384
        %vm232 = vcmp.lt.s32.totalorder %v168, 384
        %vm233 = vcmp.lt.s32.totalorder %v169, 384
        %vm234 = vcmp.lt.s32.totalorder %v170, 384
        %vm235 = vcmp.lt.s32.totalorder %v171, 384
        %vm236 = vcmp.lt.s32.totalorder %v172, 384
        %vm237 = vcmp.lt.s32.totalorder %v173, 384
        %vm238 = vcmp.lt.s32.totalorder %v174, 384
        %vm239 = vcmp.lt.s32.totalorder %v175, 384
        %vm240 = vcmp.lt.s32.totalorder %v176, 384
        %vm241 = vcmp.lt.s32.totalorder %v177, 384
        %vm242 = vmand %vm178, %vm210
        %vm243 = vmand %vm179, %vm211
        %vm244 = vmand %vm180, %vm212
        %vm245 = vmand %vm181, %vm213
        %vm246 = vmand %vm182, %vm214
        %vm247 = vmand %vm183, %vm215
        %vm248 = vmand %vm184, %vm216
        %vm249 = vmand %vm185, %vm217
        %vm250 = vmand %vm186, %vm218
        %vm251 = vmand %vm187, %vm219
        %vm252 = vmand %vm188, %vm220
        %vm253 = vmand %vm189, %vm221
        %vm254 = vmand %vm190, %vm222
        %vm255 = vmand %vm191, %vm223
        %vm256 = vmand %vm192, %vm224
        %vm257 = vmand %vm193, %vm225
        %vm258 = vmand %vm194, %vm226
        %vm259 = vmand %vm195, %vm227
        %vm260 = vmand %vm196, %vm228
        %vm261 = vmand %vm197, %vm229
        %vm262 = vmand %vm198, %vm230
        %vm263 = vmand %vm199, %vm231
        %vm264 = vmand %vm200, %vm232
        %vm265 = vmand %vm201, %vm233
        %vm266 = vmand %vm202, %vm234
        %vm267 = vmand %vm203, %vm235
        %vm268 = vmand %vm204, %vm236
        %vm269 = vmand %vm205, %vm237
        %vm270 = vmand %vm206, %vm238
        %vm271 = vmand %vm207, %vm239
        %vm272 = vmand %vm208, %vm240
        %vm273 = vmand %vm209, %vm241
        %v274 = vsel %vm242, %v146, 4294967295
        %v275 = vsel %vm243, %v147, 4294967295
        %v276 = vsel %vm244, %v148, 4294967295
        %v277 = vsel %vm245, %v149, 4294967295
        %v278 = vsel %vm246, %v150, 4294967295
        %v279 = vsel %vm247, %v151, 4294967295
        %v280 = vsel %vm248, %v152, 4294967295
        %v281 = vsel %vm249, %v153, 4294967295
        %v282 = vsel %vm250, %v154, 4294967295
        %v283 = vsel %vm251, %v155, 4294967295
        %v284 = vsel %vm252, %v156, 4294967295
        %v285 = vsel %vm253, %v157, 4294967295
        %v286 = vsel %vm254, %v158, 4294967295
        %v287 = vsel %vm255, %v159, 4294967295
        %v288 = vsel %vm256, %v160, 4294967295
        %v289 = vsel %vm257, %v161, 4294967295
        %v290 = vsel %vm258, %v162, 4294967295
        %v291 = vsel %vm259, %v163, 4294967295
        %v292 = vsel %vm260, %v164, 4294967295
        %v293 = vsel %vm261, %v165, 4294967295
        %v294 = vsel %vm262, %v166, 4294967295
        %v295 = vsel %vm263, %v167, 4294967295
        %v296 = vsel %vm264, %v168, 4294967295
        %v297 = vsel %vm265, %v169, 4294967295
        %v298 = vsel %vm266, %v170, 4294967295
        %v299 = vsel %vm267, %v171, 4294967295
        %v300 = vsel %vm268, %v172, 4294967295
        %v301 = vsel %vm269, %v173, 4294967295
        %v302 = vsel %vm270, %v174, 4294967295
        %v303 = vsel %vm271, %v175, 4294967295
        %v304 = vsel %vm272, %v176, 4294967295
        %v305 = vsel %vm273, %v177, 4294967295
        %v306 = vlaneseq
        %v307 = vand.u32 %v306, 127
        %v308 = vadd.s32 %v307, 128
        %v309 = vadd.s32 %v307, 256
        %310 = vset.pattern.permute.xlu0 0
        %311 = vperm.xlu0 %310, %v274
        %v312 = vpop.permute.xlu0 %311
        %313 = vset.pattern.permute.xlu0 0
        %314 = vperm.xlu0 %313, %v275
        %v315 = vpop.permute.xlu0 %314
        %316 = vset.pattern.permute.xlu0 0
        %317 = vperm.xlu0 %316, %v276
        %v318 = vpop.permute.xlu0 %317
        %319 = vset.pattern.permute.xlu0 0
        %320 = vperm.xlu0 %319, %v277
        %v321 = vpop.permute.xlu0 %320
        %322 = vset.pattern.permute.xlu0 0
        %323 = vperm.xlu0 %322, %v278
        %v324 = vpop.permute.xlu0 %323
        %325 = vset.pattern.permute.xlu0 0
        %326 = vperm.xlu0 %325, %v279
        %v327 = vpop.permute.xlu0 %326
        %328 = vset.pattern.permute.xlu0 0
        %329 = vperm.xlu0 %328, %v280
        %v330 = vpop.permute.xlu0 %329
        %331 = vset.pattern.permute.xlu0 0
        %332 = vperm.xlu0 %331, %v281
        %v333 = vpop.permute.xlu0 %332
        %334 = vset.pattern.permute.xlu0 0
        %335 = vperm.xlu0 %334, %v282
        %v336 = vpop.permute.xlu0 %335
        %337 = vset.pattern.permute.xlu0 0
        %338 = vperm.xlu0 %337, %v283
        %v339 = vpop.permute.xlu0 %338
        %340 = vset.pattern.permute.xlu0 0
        %341 = vperm.xlu0 %340, %v284
        %v342 = vpop.permute.xlu0 %341
        %343 = vset.pattern.permute.xlu0 0
        %344 = vperm.xlu0 %343, %v285
        %v345 = vpop.permute.xlu0 %344
        %346 = vset.pattern.permute.xlu0 0
        %347 = vperm.xlu0 %346, %v286
        %v348 = vpop.permute.xlu0 %347
        %349 = vset.pattern.permute.xlu0 0
        %350 = vperm.xlu0 %349, %v287
        %v351 = vpop.permute.xlu0 %350
        %352 = vset.pattern.permute.xlu0 0
        %353 = vperm.xlu0 %352, %v288
        %v354 = vpop.permute.xlu0 %353
        %355 = vset.pattern.permute.xlu0 0
        %356 = vperm.xlu0 %355, %v289
        %v357 = vpop.permute.xlu0 %356
        %358 = vset.pattern.permute.xlu0 0
        %359 = vperm.xlu0 %358, %v290
        %v360 = vpop.permute.xlu0 %359
        %361 = vset.pattern.permute.xlu0 0
        %362 = vperm.xlu0 %361, %v291
        %v363 = vpop.permute.xlu0 %362
        %364 = vset.pattern.permute.xlu0 0
        %365 = vperm.xlu0 %364, %v292
        %v366 = vpop.permute.xlu0 %365
        %367 = vset.pattern.permute.xlu0 0
        %368 = vperm.xlu0 %367, %v293
        %v369 = vpop.permute.xlu0 %368
        %370 = vset.pattern.permute.xlu0 0
        %371 = vperm.xlu0 %370, %v294
        %v372 = vpop.permute.xlu0 %371
        %373 = vset.pattern.permute.xlu0 0
        %374 = vperm.xlu0 %373, %v295
        %v375 = vpop.permute.xlu0 %374
        %376 = vset.pattern.permute.xlu0 0
        %377 = vperm.xlu0 %376, %v296
        %v378 = vpop.permute.xlu0 %377
        %379 = vset.pattern.permute.xlu0 0
        %380 = vperm.xlu0 %379, %v297
        %v381 = vpop.permute.xlu0 %380
        %382 = vset.pattern.permute.xlu0 0
        %383 = vperm.xlu0 %382, %v298
        %v384 = vpop.permute.xlu0 %383
        %385 = vset.pattern.permute.xlu0 0
        %386 = vperm.xlu0 %385, %v299
        %v387 = vpop.permute.xlu0 %386
        %388 = vset.pattern.permute.xlu0 0
        %389 = vperm.xlu0 %388, %v300
        %v390 = vpop.permute.xlu0 %389
        %391 = vset.pattern.permute.xlu0 0
        %392 = vperm.xlu0 %391, %v301
        %v393 = vpop.permute.xlu0 %392
        %394 = vset.pattern.permute.xlu0 0
        %395 = vperm.xlu0 %394, %v302
        %v396 = vpop.permute.xlu0 %395
        %397 = vset.pattern.permute.xlu0 0
        %398 = vperm.xlu0 %397, %v303
        %v399 = vpop.permute.xlu0 %398
        %400 = vset.pattern.permute.xlu0 0
        %401 = vperm.xlu0 %400, %v304
        %v402 = vpop.permute.xlu0 %401
        %403 = vset.pattern.permute.xlu0 0
        %404 = vperm.xlu0 %403, %v305
        %v405 = vpop.permute.xlu0 %404
        %vm406 = vcmp.eq.s32.totalorder %v307, %v312
        %vm407 = vcmp.eq.s32.totalorder %v308, %v312
        %vm408 = vcmp.eq.s32.totalorder %v309, %v312
        %vm409 = vcmp.eq.s32.totalorder %v307, %v315
        %vm410 = vcmp.eq.s32.totalorder %v308, %v315
        %vm411 = vcmp.eq.s32.totalorder %v309, %v315
        %vm412 = vcmp.eq.s32.totalorder %v307, %v318
        %vm413 = vcmp.eq.s32.totalorder %v308, %v318
        %vm414 = vcmp.eq.s32.totalorder %v309, %v318
        %vm415 = vcmp.eq.s32.totalorder %v307, %v321
        %vm416 = vcmp.eq.s32.totalorder %v308, %v321
        %vm417 = vcmp.eq.s32.totalorder %v309, %v321
        %vm418 = vcmp.eq.s32.totalorder %v307, %v324
        %vm419 = vcmp.eq.s32.totalorder %v308, %v324
        %vm420 = vcmp.eq.s32.totalorder %v309, %v324
        %vm421 = vcmp.eq.s32.totalorder %v307, %v327
        %vm422 = vcmp.eq.s32.totalorder %v308, %v327
        %vm423 = vcmp.eq.s32.totalorder %v309, %v327
        %vm424 = vcmp.eq.s32.totalorder %v307, %v330
        %vm425 = vcmp.eq.s32.totalorder %v308, %v330
        %vm426 = vcmp.eq.s32.totalorder %v309, %v330
        %vm427 = vcmp.eq.s32.totalorder %v307, %v333
        %vm428 = vcmp.eq.s32.totalorder %v308, %v333
        %vm429 = vcmp.eq.s32.totalorder %v309, %v333
        %vm430 = vcmp.eq.s32.totalorder %v307, %v336
        %vm431 = vcmp.eq.s32.totalorder %v308, %v336
        %vm432 = vcmp.eq.s32.totalorder %v309, %v336
        %vm433 = vcmp.eq.s32.totalorder %v307, %v339
        %vm434 = vcmp.eq.s32.totalorder %v308, %v339
        %vm435 = vcmp.eq.s32.totalorder %v309, %v339
        %vm436 = vcmp.eq.s32.totalorder %v307, %v342
        %vm437 = vcmp.eq.s32.totalorder %v308, %v342
        %vm438 = vcmp.eq.s32.totalorder %v309, %v342
        %vm439 = vcmp.eq.s32.totalorder %v307, %v345
        %vm440 = vcmp.eq.s32.totalorder %v308, %v345
        %vm441 = vcmp.eq.s32.totalorder %v309, %v345
        %vm442 = vcmp.eq.s32.totalorder %v307, %v348
        %vm443 = vcmp.eq.s32.totalorder %v308, %v348
        %vm444 = vcmp.eq.s32.totalorder %v309, %v348
        %vm445 = vcmp.eq.s32.totalorder %v307, %v351
        %vm446 = vcmp.eq.s32.totalorder %v308, %v351
        %vm447 = vcmp.eq.s32.totalorder %v309, %v351
        %vm448 = vcmp.eq.s32.totalorder %v307, %v354
        %vm449 = vcmp.eq.s32.totalorder %v308, %v354
        %vm450 = vcmp.eq.s32.totalorder %v309, %v354
        %vm451 = vcmp.eq.s32.totalorder %v307, %v357
        %vm452 = vcmp.eq.s32.totalorder %v308, %v357
        %vm453 = vcmp.eq.s32.totalorder %v309, %v357
        %vm454 = vcmp.eq.s32.totalorder %v307, %v360
        %vm455 = vcmp.eq.s32.totalorder %v308, %v360
        %vm456 = vcmp.eq.s32.totalorder %v309, %v360
        %vm457 = vcmp.eq.s32.totalorder %v307, %v363
        %vm458 = vcmp.eq.s32.totalorder %v308, %v363
        %vm459 = vcmp.eq.s32.totalorder %v309, %v363
        %vm460 = vcmp.eq.s32.totalorder %v307, %v366
        %vm461 = vcmp.eq.s32.totalorder %v308, %v366
        %vm462 = vcmp.eq.s32.totalorder %v309, %v366
        %vm463 = vcmp.eq.s32.totalorder %v307, %v369
        %vm464 = vcmp.eq.s32.totalorder %v308, %v369
        %vm465 = vcmp.eq.s32.totalorder %v309, %v369
        %vm466 = vcmp.eq.s32.totalorder %v307, %v372
        %vm467 = vcmp.eq.s32.totalorder %v308, %v372
        %vm468 = vcmp.eq.s32.totalorder %v309, %v372
        %vm469 = vcmp.eq.s32.totalorder %v307, %v375
        %vm470 = vcmp.eq.s32.totalorder %v308, %v375
        %vm471 = vcmp.eq.s32.totalorder %v309, %v375
        %vm472 = vcmp.eq.s32.totalorder %v307, %v378
        %vm473 = vcmp.eq.s32.totalorder %v308, %v378
        %vm474 = vcmp.eq.s32.totalorder %v309, %v378
        %vm475 = vcmp.eq.s32.totalorder %v307, %v381
        %vm476 = vcmp.eq.s32.totalorder %v308, %v381
        %vm477 = vcmp.eq.s32.totalorder %v309, %v381
        %vm478 = vcmp.eq.s32.totalorder %v307, %v384
        %vm479 = vcmp.eq.s32.totalorder %v308, %v384
        %vm480 = vcmp.eq.s32.totalorder %v309, %v384
        %vm481 = vcmp.eq.s32.totalorder %v307, %v387
        %vm482 = vcmp.eq.s32.totalorder %v308, %v387
        %vm483 = vcmp.eq.s32.totalorder %v309, %v387
        %vm484 = vcmp.eq.s32.totalorder %v307, %v390
        %vm485 = vcmp.eq.s32.totalorder %v308, %v390
        %vm486 = vcmp.eq.s32.totalorder %v309, %v390
        %vm487 = vcmp.eq.s32.totalorder %v307, %v393
        %vm488 = vcmp.eq.s32.totalorder %v308, %v393
        %vm489 = vcmp.eq.s32.totalorder %v309, %v393
        %vm490 = vcmp.eq.s32.totalorder %v307, %v396
        %vm491 = vcmp.eq.s32.totalorder %v308, %v396
        %vm492 = vcmp.eq.s32.totalorder %v309, %v396
        %vm493 = vcmp.eq.s32.totalorder %v307, %v399
        %vm494 = vcmp.eq.s32.totalorder %v308, %v399
        %vm495 = vcmp.eq.s32.totalorder %v309, %v399
        %vm496 = vcmp.eq.s32.totalorder %v307, %v402
        %vm497 = vcmp.eq.s32.totalorder %v308, %v402
        %vm498 = vcmp.eq.s32.totalorder %v309, %v402
        %vm499 = vcmp.eq.s32.totalorder %v307, %v405
        %vm500 = vcmp.eq.s32.totalorder %v308, %v405
        %vm501 = vcmp.eq.s32.totalorder %v309, %v405
        %v502 = vsel %vm406, 1, 0
        %v503 = vsel %vm407, 1, 0
        %v504 = vsel %vm408, 1, 0
        %v505 = vsel %vm409, 1, 0
        %v506 = vsel %vm410, 1, 0
        %v507 = vsel %vm411, 1, 0
        %v508 = vsel %vm412, 1, 0
        %v509 = vsel %vm413, 1, 0
        %v510 = vsel %vm414, 1, 0
        %v511 = vsel %vm415, 1, 0
        %v512 = vsel %vm416, 1, 0
        %v513 = vsel %vm417, 1, 0
        %v514 = vsel %vm418, 1, 0
        %v515 = vsel %vm419, 1, 0
        %v516 = vsel %vm420, 1, 0
        %v517 = vsel %vm421, 1, 0
        %v518 = vsel %vm422, 1, 0
        %v519 = vsel %vm423, 1, 0
        %v520 = vsel %vm424, 1, 0
        %v521 = vsel %vm425, 1, 0
        %v522 = vsel %vm426, 1, 0
        %v523 = vsel %vm427, 1, 0
        %v524 = vsel %vm428, 1, 0
        %v525 = vsel %vm429, 1, 0
        %v526 = vsel %vm430, 1, 0
        %v527 = vsel %vm431, 1, 0
        %v528 = vsel %vm432, 1, 0
        %v529 = vsel %vm433, 1, 0
        %v530 = vsel %vm434, 1, 0
        %v531 = vsel %vm435, 1, 0
        %v532 = vsel %vm436, 1, 0
        %v533 = vsel %vm437, 1, 0
        %v534 = vsel %vm438, 1, 0
        %v535 = vsel %vm439, 1, 0
        %v536 = vsel %vm440, 1, 0
        %v537 = vsel %vm441, 1, 0
        %v538 = vsel %vm442, 1, 0
        %v539 = vsel %vm443, 1, 0
        %v540 = vsel %vm444, 1, 0
        %v541 = vsel %vm445, 1, 0
        %v542 = vsel %vm446, 1, 0
        %v543 = vsel %vm447, 1, 0
        %v544 = vsel %vm448, 1, 0
        %v545 = vsel %vm449, 1, 0
        %v546 = vsel %vm450, 1, 0
        %v547 = vsel %vm451, 1, 0
        %v548 = vsel %vm452, 1, 0
        %v549 = vsel %vm453, 1, 0
        %v550 = vsel %vm454, 1, 0
        %v551 = vsel %vm455, 1, 0
        %v552 = vsel %vm456, 1, 0
        %v553 = vsel %vm457, 1, 0
        %v554 = vsel %vm458, 1, 0
        %v555 = vsel %vm459, 1, 0
        %v556 = vsel %vm460, 1, 0
        %v557 = vsel %vm461, 1, 0
        %v558 = vsel %vm462, 1, 0
        %v559 = vsel %vm463, 1, 0
        %v560 = vsel %vm464, 1, 0
        %v561 = vsel %vm465, 1, 0
        %v562 = vsel %vm466, 1, 0
        %v563 = vsel %vm467, 1, 0
        %v564 = vsel %vm468, 1, 0
        %v565 = vsel %vm469, 1, 0
        %v566 = vsel %vm470, 1, 0
        %v567 = vsel %vm471, 1, 0
        %v568 = vsel %vm472, 1, 0
        %v569 = vsel %vm473, 1, 0
        %v570 = vsel %vm474, 1, 0
        %v571 = vsel %vm475, 1, 0
        %v572 = vsel %vm476, 1, 0
        %v573 = vsel %vm477, 1, 0
        %v574 = vsel %vm478, 1, 0
        %v575 = vsel %vm479, 1, 0
        %v576 = vsel %vm480, 1, 0
        %v577 = vsel %vm481, 1, 0
        %v578 = vsel %vm482, 1, 0
        %v579 = vsel %vm483, 1, 0
        %v580 = vsel %vm484, 1, 0
        %v581 = vsel %vm485, 1, 0
        %v582 = vsel %vm486, 1, 0
        %v583 = vsel %vm487, 1, 0
        %v584 = vsel %vm488, 1, 0
        %v585 = vsel %vm489, 1, 0
        %v586 = vsel %vm490, 1, 0
        %v587 = vsel %vm491, 1, 0
        %v588 = vsel %vm492, 1, 0
        %v589 = vsel %vm493, 1, 0
        %v590 = vsel %vm494, 1, 0
        %v591 = vsel %vm495, 1, 0
        %v592 = vsel %vm496, 1, 0
        %v593 = vsel %vm497, 1, 0
        %v594 = vsel %vm498, 1, 0
        %v595 = vsel %vm499, 1, 0
        %v596 = vsel %vm500, 1, 0
        %v597 = vsel %vm501, 1, 0
        %v598 = vcvt.s32.f32 %v502
        %v599 = vcvt.s32.f32 %v503
        %v600 = vcvt.s32.f32 %v504
        %v601 = vcvt.s32.f32 %v505
        %v602 = vcvt.s32.f32 %v506
        %v603 = vcvt.s32.f32 %v507
        %v604 = vcvt.s32.f32 %v508
        %v605 = vcvt.s32.f32 %v509
        %v606 = vcvt.s32.f32 %v510
        %v607 = vcvt.s32.f32 %v511
        %v608 = vcvt.s32.f32 %v512
        %v609 = vcvt.s32.f32 %v513
        %v610 = vcvt.s32.f32 %v514
        %v611 = vcvt.s32.f32 %v515
        %v612 = vcvt.s32.f32 %v516
        %v613 = vcvt.s32.f32 %v517
        %v614 = vcvt.s32.f32 %v518
        %v615 = vcvt.s32.f32 %v519
        %v616 = vcvt.s32.f32 %v520
        %v617 = vcvt.s32.f32 %v521
        %v618 = vcvt.s32.f32 %v522
        %v619 = vcvt.s32.f32 %v523
        %v620 = vcvt.s32.f32 %v524
        %v621 = vcvt.s32.f32 %v525
        %v622 = vcvt.s32.f32 %v526
        %v623 = vcvt.s32.f32 %v527
        %v624 = vcvt.s32.f32 %v528
        %v625 = vcvt.s32.f32 %v529
        %v626 = vcvt.s32.f32 %v530
        %v627 = vcvt.s32.f32 %v531
        %v628 = vcvt.s32.f32 %v532
        %v629 = vcvt.s32.f32 %v533
        %v630 = vcvt.s32.f32 %v534
        %v631 = vcvt.s32.f32 %v535
        %v632 = vcvt.s32.f32 %v536
        %v633 = vcvt.s32.f32 %v537
        %v634 = vcvt.s32.f32 %v538
        %v635 = vcvt.s32.f32 %v539
        %v636 = vcvt.s32.f32 %v540
        %v637 = vcvt.s32.f32 %v541
        %v638 = vcvt.s32.f32 %v542
        %v639 = vcvt.s32.f32 %v543
        %v640 = vcvt.s32.f32 %v544
        %v641 = vcvt.s32.f32 %v545
        %v642 = vcvt.s32.f32 %v546
        %v643 = vcvt.s32.f32 %v547
        %v644 = vcvt.s32.f32 %v548
        %v645 = vcvt.s32.f32 %v549
        %v646 = vcvt.s32.f32 %v550
        %v647 = vcvt.s32.f32 %v551
        %v648 = vcvt.s32.f32 %v552
        %v649 = vcvt.s32.f32 %v553
        %v650 = vcvt.s32.f32 %v554
        %v651 = vcvt.s32.f32 %v555
        %v652 = vcvt.s32.f32 %v556
        %v653 = vcvt.s32.f32 %v557
        %v654 = vcvt.s32.f32 %v558
        %v655 = vcvt.s32.f32 %v559
        %v656 = vcvt.s32.f32 %v560
        %v657 = vcvt.s32.f32 %v561
        %v658 = vcvt.s32.f32 %v562
        %v659 = vcvt.s32.f32 %v563
        %v660 = vcvt.s32.f32 %v564
        %v661 = vcvt.s32.f32 %v565
        %v662 = vcvt.s32.f32 %v566
        %v663 = vcvt.s32.f32 %v567
        %v664 = vcvt.s32.f32 %v568
        %v665 = vcvt.s32.f32 %v569
        %v666 = vcvt.s32.f32 %v570
        %v667 = vcvt.s32.f32 %v571
        %v668 = vcvt.s32.f32 %v572
        %v669 = vcvt.s32.f32 %v573
        %v670 = vcvt.s32.f32 %v574
        %v671 = vcvt.s32.f32 %v575
        %v672 = vcvt.s32.f32 %v576
        %v673 = vcvt.s32.f32 %v577
        %v674 = vcvt.s32.f32 %v578
        %v675 = vcvt.s32.f32 %v579
        %v676 = vcvt.s32.f32 %v580
        %v677 = vcvt.s32.f32 %v581
        %v678 = vcvt.s32.f32 %v582
        %v679 = vcvt.s32.f32 %v583
        %v680 = vcvt.s32.f32 %v584
        %v681 = vcvt.s32.f32 %v585
        %v682 = vcvt.s32.f32 %v586
        %v683 = vcvt.s32.f32 %v587
        %v684 = vcvt.s32.f32 %v588
        %v685 = vcvt.s32.f32 %v589
        %v686 = vcvt.s32.f32 %v590
        %v687 = vcvt.s32.f32 %v591
        %v688 = vcvt.s32.f32 %v592
        %v689 = vcvt.s32.f32 %v593
        %v690 = vcvt.s32.f32 %v594
        %v691 = vcvt.s32.f32 %v595
        %v692 = vcvt.s32.f32 %v596
        %v693 = vcvt.s32.f32 %v597
        %v694 = vpack.c.bf16 %v601, %v598
        %v695 = vpack.c.bf16 %v602, %v599
        %v696 = vpack.c.bf16 %v603, %v600
        %v697 = vpack.c.bf16 %v607, %v604
        %v698 = vpack.c.bf16 %v608, %v605
        %v699 = vpack.c.bf16 %v609, %v606
        %v700 = vpack.c.bf16 %v613, %v610
        %v701 = vpack.c.bf16 %v614, %v611
        %v702 = vpack.c.bf16 %v615, %v612
        %v703 = vpack.c.bf16 %v619, %v616
        %v704 = vpack.c.bf16 %v620, %v617
        %v705 = vpack.c.bf16 %v621, %v618
        %v706 = vpack.c.bf16 %v625, %v622
        %v707 = vpack.c.bf16 %v626, %v623
        %v708 = vpack.c.bf16 %v627, %v624
        %v709 = vpack.c.bf16 %v631, %v628
        %v710 = vpack.c.bf16 %v632, %v629
        %v711 = vpack.c.bf16 %v633, %v630
        %v712 = vpack.c.bf16 %v637, %v634
        %v713 = vpack.c.bf16 %v638, %v635
        %v714 = vpack.c.bf16 %v639, %v636
        %v715 = vpack.c.bf16 %v643, %v640
        %v716 = vpack.c.bf16 %v644, %v641
        %v717 = vpack.c.bf16 %v645, %v642
        %v718 = vpack.c.bf16 %v649, %v646
        %v719 = vpack.c.bf16 %v650, %v647
        %v720 = vpack.c.bf16 %v651, %v648
        %v721 = vpack.c.bf16 %v655, %v652
        %v722 = vpack.c.bf16 %v656, %v653
        %v723 = vpack.c.bf16 %v657, %v654
        %v724 = vpack.c.bf16 %v661, %v658
        %v725 = vpack.c.bf16 %v662, %v659
        %v726 = vpack.c.bf16 %v663, %v660
        %v727 = vpack.c.bf16 %v667, %v664
        %v728 = vpack.c.bf16 %v668, %v665
        %v729 = vpack.c.bf16 %v669, %v666
        %v730 = vpack.c.bf16 %v673, %v670
        %v731 = vpack.c.bf16 %v674, %v671
        %v732 = vpack.c.bf16 %v675, %v672
        %v733 = vpack.c.bf16 %v679, %v676
        %v734 = vpack.c.bf16 %v680, %v677
        %v735 = vpack.c.bf16 %v681, %v678
        %v736 = vpack.c.bf16 %v685, %v682
        %v737 = vpack.c.bf16 %v686, %v683
        %v738 = vpack.c.bf16 %v687, %v684
        %v739 = vpack.c.bf16 %v691, %v688
        %v740 = vpack.c.bf16 %v692, %v689
        %v741 = vpack.c.bf16 %v693, %v690
        %v742 = vld [vmem:[%s1] sm:$0xf]
        %v743 = vld [vmem:[%s1 + $0x4] sm:$0xf]
        %v744 = vld [vmem:[%s1 + $0x8] sm:$0xf]
        %v745 = vld [vmem:[%s1 + $0xc] sm:$0xf]
        %v746 = vld [vmem:[%s1 + $0x10] sm:$0xf]
        %v747 = vld [vmem:[%s1 + $0x14] sm:$0xf]
        %v748 = vld [vmem:[%s1 + $0x18] sm:$0xf]
        %v749 = vld [vmem:[%s1 + $0x1c] sm:$0xf]
        %v750 = vld [vmem:[%s1 + $0x20] sm:$0xf]
        %v751 = vld [vmem:[%s1 + $0x24] sm:$0xf]
        %v752 = vld [vmem:[%s1 + $0x28] sm:$0xf]
        %v753 = vld [vmem:[%s1 + $0x2c] sm:$0xf]
        %v754 = vld [vmem:[%s1 + $0x30] sm:$0xf]
        %v755 = vld [vmem:[%s1 + $0x34] sm:$0xf]
        %v756 = vld [vmem:[%s1 + $0x38] sm:$0xf]
        %v757 = vld [vmem:[%s1 + $0x3c] sm:$0xf]
        %v758 = vld [vmem:[%s1 + $0x40] sm:$0xf]
        %v759 = vld [vmem:[%s1 + $0x44] sm:$0xf]
        %v760 = vld [vmem:[%s1 + $0x48] sm:$0xf]
        %v761 = vld [vmem:[%s1 + $0x4c] sm:$0xf]
        %v762 = vld [vmem:[%s1 + $0x50] sm:$0xf]
        %v763 = vld [vmem:[%s1 + $0x54] sm:$0xf]
        %v764 = vld [vmem:[%s1 + $0x58] sm:$0xf]
        %v765 = vld [vmem:[%s1 + $0x5c] sm:$0xf]
        %v766 = vld [vmem:[%s1 + $0x60] sm:$0xf]
        %v767 = vld [vmem:[%s1 + $0x64] sm:$0xf]
        %v768 = vld [vmem:[%s1 + $0x68] sm:$0xf]
        %v769 = vld [vmem:[%s1 + $0x6c] sm:$0xf]
        %v770 = vld [vmem:[%s1 + $0x70] sm:$0xf]
        %v771 = vld [vmem:[%s1 + $0x74] sm:$0xf]
        %v772 = vld [vmem:[%s1 + $0x78] sm:$0xf]
        %v773 = vld [vmem:[%s1 + $0x7c] sm:$0xf]
        %v774 = vld [vmem:[%s1 + $0x80] sm:$0xf]
        %v775 = vld [vmem:[%s1 + $0x84] sm:$0xf]
        %v776 = vld [vmem:[%s1 + $0x88] sm:$0xf]
        %v777 = vld [vmem:[%s1 + $0x8c] sm:$0xf]
        %v778 = vld [vmem:[%s1 + $0x90] sm:$0xf]
        %v779 = vld [vmem:[%s1 + $0x94] sm:$0xf]
        %v780 = vld [vmem:[%s1 + $0x98] sm:$0xf]
        %v781 = vld [vmem:[%s1 + $0x9c] sm:$0xf]
        %v782 = vld [vmem:[%s1 + $0xa0] sm:$0xf]
        %v783 = vld [vmem:[%s1 + $0xa4] sm:$0xf]
        %v784 = vld [vmem:[%s1 + $0xa8] sm:$0xf]
        %v785 = vld [vmem:[%s1 + $0xac] sm:$0xf]
        %v786 = vld [vmem:[%s1 + $0xb0] sm:$0xf]
        %v787 = vld [vmem:[%s1 + $0xb4] sm:$0xf]
        %v788 = vld [vmem:[%s1 + $0xb8] sm:$0xf]
        %v789 = vld [vmem:[%s1 + $0xbc] sm:$0xf]
        %v838 = vunpack.c.l.b16 %v742
        %v839 = vunpack.c.l.b16 %v743
        %v840 = vunpack.c.l.b16 %v744
        %v841 = vunpack.c.l.b16 %v745
        %v842 = vunpack.c.l.b16 %v746
        %v843 = vunpack.c.l.b16 %v747
        %v844 = vunpack.c.l.b16 %v748
        %v845 = vunpack.c.l.b16 %v749
        %v846 = vunpack.c.l.b16 %v750
        %v847 = vunpack.c.l.b16 %v751
        %v848 = vunpack.c.l.b16 %v752
        %v849 = vunpack.c.l.b16 %v753
        %v850 = vunpack.c.l.b16 %v754
        %v851 = vunpack.c.l.b16 %v755
        %v852 = vunpack.c.l.b16 %v756
        %v853 = vunpack.c.l.b16 %v757
        %v854 = vunpack.c.l.b16 %v758
        %v855 = vunpack.c.l.b16 %v759
        %v856 = vunpack.c.l.b16 %v760
        %v857 = vunpack.c.l.b16 %v761
        %v858 = vunpack.c.l.b16 %v762
        %v859 = vunpack.c.l.b16 %v763
        %v860 = vunpack.c.l.b16 %v764
        %v861 = vunpack.c.l.b16 %v765
        %v862 = vunpack.c.l.b16 %v766
        %v863 = vunpack.c.l.b16 %v767
        %v864 = vunpack.c.l.b16 %v768
        %v865 = vunpack.c.l.b16 %v769
        %v866 = vunpack.c.l.b16 %v770
        %v867 = vunpack.c.l.b16 %v771
        %v868 = vunpack.c.l.b16 %v772
        %v869 = vunpack.c.l.b16 %v773
        %v870 = vunpack.c.l.b16 %v774
        %v871 = vunpack.c.l.b16 %v775
        %v872 = vunpack.c.l.b16 %v776
        %v873 = vunpack.c.l.b16 %v777
        %v874 = vunpack.c.l.b16 %v778
        %v875 = vunpack.c.l.b16 %v779
        %v876 = vunpack.c.l.b16 %v780
        %v877 = vunpack.c.l.b16 %v781
        %v878 = vunpack.c.l.b16 %v782
        %v879 = vunpack.c.l.b16 %v783
        %v880 = vunpack.c.l.b16 %v784
        %v881 = vunpack.c.l.b16 %v785
        %v882 = vunpack.c.l.b16 %v786
        %v883 = vunpack.c.l.b16 %v787
        %v884 = vunpack.c.l.b16 %v788
        %v885 = vunpack.c.l.b16 %v789
        %v886 = vpack.c.b16 %v839, %v838
        %v887 = vpack.c.b16 %v841, %v840
        %v888 = vpack.c.b16 %v843, %v842
        %v889 = vpack.c.b16 %v845, %v844
        %v890 = vpack.c.b16 %v847, %v846
        %v891 = vpack.c.b16 %v849, %v848
        %v892 = vpack.c.b16 %v851, %v850
        %v893 = vpack.c.b16 %v853, %v852
        %v894 = vpack.c.b16 %v855, %v854
        %v895 = vpack.c.b16 %v857, %v856
        %v896 = vpack.c.b16 %v859, %v858
        %v897 = vpack.c.b16 %v861, %v860
        %v898 = vpack.c.b16 %v863, %v862
        %v899 = vpack.c.b16 %v865, %v864
        %v900 = vpack.c.b16 %v867, %v866
        %v901 = vpack.c.b16 %v869, %v868
        %v902 = vpack.c.b16 %v871, %v870
        %v903 = vpack.c.b16 %v873, %v872
        %v904 = vpack.c.b16 %v875, %v874
        %v905 = vpack.c.b16 %v877, %v876
        %v906 = vpack.c.b16 %v879, %v878
        %v907 = vpack.c.b16 %v881, %v880
        %v908 = vpack.c.b16 %v883, %v882
        %v909 = vpack.c.b16 %v885, %v884
        %934 = vmatprep.subr.bf16.mxu0 0
        %935 = vmatpush1.bf16.msra.mxu0 %v886
        %936 = vmatprep.subr.bf16.mxu0 0
        %937 = vmatpush1.bf16.msra.mxu0 %v887
        %938 = vmatprep.subr.bf16.mxu0 0
        %939 = vmatpush1.bf16.msra.mxu0 %v888
        %940 = vmatprep.subr.bf16.mxu0 0
        %941 = vmatpush1.bf16.msra.mxu0 %v889
        %942 = vmatprep.subr.bf16.mxu0 0
        %943 = vmatpush1.bf16.msra.mxu0 %v890
        %944 = vmatprep.subr.bf16.mxu0 0
        %945 = vmatpush1.bf16.msra.mxu0 %v891
        %946 = vmatprep.subr.bf16.mxu0 0
        %947 = vmatpush1.bf16.msra.mxu0 %v892
        %948 = vmatprep.subr.bf16.mxu0 0
        %949 = vmatpush1.bf16.msra.mxu0 %v893
        %950 = vmatprep.subr.bf16.mxu0 0
        %951 = vmatpush1.bf16.msra.mxu0 %v894
        %952 = vmatprep.subr.bf16.mxu0 0
        %953 = vmatpush1.bf16.msra.mxu0 %v895
        %954 = vmatprep.subr.bf16.mxu0 0
        %955 = vmatpush1.bf16.msra.mxu0 %v896
        %956 = vmatprep.subr.bf16.mxu0 0
        %957 = vmatpush1.bf16.msra.mxu0 %v897
        %958 = vmatprep.subr.bf16.mxu0 0
        %959 = vmatpush1.bf16.msra.mxu0 %v898
        %960 = vmatprep.subr.bf16.mxu0 0
        %961 = vmatpush1.bf16.msra.mxu0 %v899
        %962 = vmatprep.subr.bf16.mxu0 0
        %963 = vmatpush1.bf16.msra.mxu0 %v900
        %964 = vmatprep.subr.bf16.mxu0 0
        %965 = vmatpush1.bf16.msra.mxu0 %v901
        %966 = vmatprep.mubr.bf16.mxu0 %v695
        %967 = vmatmul.mubr.bf16.gmra.mrb[0].mxu0 %v694
        %v968 = vpop.f32.mrb[0].mxu0
        %v969 = vadd.f32 0.0, %v968
        %v970 = vpop.f32.mrb[0].mxu0
        %v971 = vpop.f32.mrb[0].mxu0
        %v972 = vadd.f32 0.0, %v971
        %v973 = vpop.f32.mrb[0].mxu0
        %974 = vmatprep.mubr.bf16.mxu0 %v698
        %975 = vmatmul.mubr.bf16.gmra.mrb[0].mxu0 %v697
        %v976 = vpop.f32.mrb[0].mxu0
        %v977 = vadd.f32 0.0, %v976
        %v978 = vpop.f32.mrb[0].mxu0
        %v979 = vpop.f32.mrb[0].mxu0
        %v980 = vadd.f32 0.0, %v979
        %v981 = vpop.f32.mrb[0].mxu0
        %982 = vmatprep.mubr.bf16.mxu0 %v701
        %983 = vmatmul.mubr.bf16.gmra.mrb[0].mxu0 %v700
        %v984 = vpop.f32.mrb[0].mxu0
        %v985 = vadd.f32 0.0, %v984
        %v986 = vpop.f32.mrb[0].mxu0
        %v987 = vpop.f32.mrb[0].mxu0
        %v988 = vadd.f32 0.0, %v987
        %v989 = vpop.f32.mrb[0].mxu0
        %990 = vmatprep.mubr.bf16.mxu0 %v704
        %991 = vmatmul.mubr.bf16.gmra.mrb[0].mxu0 %v703
        %v992 = vpop.f32.mrb[0].mxu0
        %v993 = vadd.f32 0.0, %v992
        %v994 = vpop.f32.mrb[0].mxu0
        %v995 = vpop.f32.mrb[0].mxu0
        %v996 = vadd.f32 0.0, %v995
        %v997 = vpop.f32.mrb[0].mxu0
        %998 = vmatprep.mubr.bf16.mxu0 %v707
        %999 = vmatmul.mubr.bf16.gmra.mrb[0].mxu0 %v706
        %v1000 = vpop.f32.mrb[0].mxu0
        %v1001 = vadd.f32 0.0, %v1000
        %v1002 = vpop.f32.mrb[0].mxu0
        %v1003 = vpop.f32.mrb[0].mxu0
        %v1004 = vadd.f32 0.0, %v1003
        %v1005 = vpop.f32.mrb[0].mxu0
        %1006 = vmatprep.mubr.bf16.mxu0 %v710
        %1007 = vmatmul.mubr.bf16.gmra.mrb[0].mxu0 %v709
        %v1008 = vpop.f32.mrb[0].mxu0
        %v1009 = vadd.f32 0.0, %v1008
        %v1010 = vpop.f32.mrb[0].mxu0
        %v1011 = vpop.f32.mrb[0].mxu0
        %v1012 = vadd.f32 0.0, %v1011
        %v1013 = vpop.f32.mrb[0].mxu0
        %1014 = vmatprep.mubr.bf16.mxu0 %v713
        %1015 = vmatmul.mubr.bf16.gmra.mrb[0].mxu0 %v712
        %v1016 = vpop.f32.mrb[0].mxu0
        %v1017 = vadd.f32 0.0, %v1016
        %v1018 = vpop.f32.mrb[0].mxu0
        %v1019 = vpop.f32.mrb[0].mxu0
        %v1020 = vadd.f32 0.0, %v1019
        %v1021 = vpop.f32.mrb[0].mxu0
        %1022 = vmatprep.mubr.bf16.mxu0 %v716
        %1023 = vmatmul.mubr.bf16.gmra.mrb[0].mxu0 %v715
        %v1024 = vpop.f32.mrb[0].mxu0
        %v1025 = vadd.f32 0.0, %v1024
        %v1026 = vpop.f32.mrb[0].mxu0
        %v1027 = vpop.f32.mrb[0].mxu0
        %v1028 = vadd.f32 0.0, %v1027
        %v1029 = vpop.f32.mrb[0].mxu0
        %1030 = vmatprep.mubr.bf16.mxu0 %v719
        %1031 = vmatmul.mubr.bf16.gmra.mrb[0].mxu0 %v718
        %v1032 = vpop.f32.mrb[0].mxu0
        %v1033 = vadd.f32 0.0, %v1032
        %v1034 = vpop.f32.mrb[0].mxu0
        %v1035 = vpop.f32.mrb[0].mxu0
        %v1036 = vadd.f32 0.0, %v1035
        %v1037 = vpop.f32.mrb[0].mxu0
        %1038 = vmatprep.mubr.bf16.mxu0 %v722
        %1039 = vmatmul.mubr.bf16.gmra.mrb[0].mxu0 %v721
        %v1040 = vpop.f32.mrb[0].mxu0
        %v1041 = vadd.f32 0.0, %v1040
        %v1042 = vpop.f32.mrb[0].mxu0
        %v1043 = vpop.f32.mrb[0].mxu0
        %v1044 = vadd.f32 0.0, %v1043
        %v1045 = vpop.f32.mrb[0].mxu0
        %1046 = vmatprep.mubr.bf16.mxu0 %v725
        %1047 = vmatmul.mubr.bf16.gmra.mrb[0].mxu0 %v724
        %v1048 = vpop.f32.mrb[0].mxu0
        %v1049 = vadd.f32 0.0, %v1048
        %v1050 = vpop.f32.mrb[0].mxu0
        %v1051 = vpop.f32.mrb[0].mxu0
        %v1052 = vadd.f32 0.0, %v1051
        %v1053 = vpop.f32.mrb[0].mxu0
        %1054 = vmatprep.mubr.bf16.mxu0 %v728
        %1055 = vmatmul.mubr.bf16.gmra.mrb[0].mxu0 %v727
        %v1056 = vpop.f32.mrb[0].mxu0
        %v1057 = vadd.f32 0.0, %v1056
        %v1058 = vpop.f32.mrb[0].mxu0
        %v1059 = vpop.f32.mrb[0].mxu0
        %v1060 = vadd.f32 0.0, %v1059
        %v1061 = vpop.f32.mrb[0].mxu0
        %1062 = vmatprep.mubr.bf16.mxu0 %v731
        %1063 = vmatmul.mubr.bf16.gmra.mrb[0].mxu0 %v730
        %v1064 = vpop.f32.mrb[0].mxu0
        %v1065 = vadd.f32 0.0, %v1064
        %v1066 = vpop.f32.mrb[0].mxu0
        %v1067 = vpop.f32.mrb[0].mxu0
        %v1068 = vadd.f32 0.0, %v1067
        %v1069 = vpop.f32.mrb[0].mxu0
        %1070 = vmatprep.mubr.bf16.mxu0 %v734
        %1071 = vmatmul.mubr.bf16.gmra.mrb[0].mxu0 %v733
        %v1072 = vpop.f32.mrb[0].mxu0
        %v1073 = vadd.f32 0.0, %v1072
        %v1074 = vpop.f32.mrb[0].mxu0
        %v1075 = vpop.f32.mrb[0].mxu0
        %v1076 = vadd.f32 0.0, %v1075
        %v1077 = vpop.f32.mrb[0].mxu0
        %1078 = vmatprep.mubr.bf16.mxu0 %v737
        %1079 = vmatmul.mubr.bf16.gmra.mrb[0].mxu0 %v736
        %v1080 = vpop.f32.mrb[0].mxu0
        %v1081 = vadd.f32 0.0, %v1080
        %v1082 = vpop.f32.mrb[0].mxu0
        %v1083 = vpop.f32.mrb[0].mxu0
        %v1084 = vadd.f32 0.0, %v1083
        %v1085 = vpop.f32.mrb[0].mxu0
        %1086 = vmatprep.mubr.bf16.mxu0 %v740
        %1087 = vmatmul.mubr.bf16.gmra.mrb[0].mxu0 %v739
        %v1088 = vpop.f32.mrb[0].mxu0
        %v1089 = vadd.f32 0.0, %v1088
        %v1090 = vpop.f32.mrb[0].mxu0
        %v1091 = vpop.f32.mrb[0].mxu0
        %v1092 = vadd.f32 0.0, %v1091
        %v1093 = vpop.f32.mrb[0].mxu0
        %1094 = vdwg.mxu0
        %1095 = vmatprep.subr.bf16.mxu0 0
        %1096 = vmatpush1.bf16.msra.mxu0 %v902
        %1097 = vmatprep.subr.bf16.mxu0 0
        %1098 = vmatpush1.bf16.msra.mxu0 %v903
        %1099 = vmatprep.subr.bf16.mxu0 0
        %1100 = vmatpush1.bf16.msra.mxu0 %v904
        %1101 = vmatprep.subr.bf16.mxu0 0
        %1102 = vmatpush1.bf16.msra.mxu0 %v905
        %1103 = vmatprep.subr.bf16.mxu0 0
        %1104 = vmatpush1.bf16.msra.mxu0 %v906
        %1105 = vmatprep.subr.bf16.mxu0 0
        %1106 = vmatpush1.bf16.msra.mxu0 %v907
        %1107 = vmatprep.subr.bf16.mxu0 0
        %1108 = vmatpush1.bf16.msra.mxu0 %v908
        %1109 = vmatprep.subr.bf16.mxu0 0
        %1110 = vmatpush1.bf16.msra.mxu0 %v909
        %1111 = vmatprep.subr.bf16.mxu0 0
        %1112 = vmatpush1.bf16.msra.mxu0 0
        %1113 = vmatprep.subr.bf16.mxu0 0
        %1114 = vmatpush1.bf16.msra.mxu0 0
        %1115 = vmatprep.subr.bf16.mxu0 0
        %1116 = vmatpush1.bf16.msra.mxu0 0
        %1117 = vmatprep.subr.bf16.mxu0 0
        %1118 = vmatpush1.bf16.msra.mxu0 0
        %1119 = vmatprep.subr.bf16.mxu0 0
        %1120 = vmatpush1.bf16.msra.mxu0 0
        %1121 = vmatprep.subr.bf16.mxu0 0
        %1122 = vmatpush1.bf16.msra.mxu0 0
        %1123 = vmatprep.subr.bf16.mxu0 0
        %1124 = vmatpush1.bf16.msra.mxu0 0
        %1125 = vmatprep.subr.bf16.mxu0 0
        %1126 = vmatpush1.bf16.msra.mxu0 0
        %1127 = vmatprep.mubr.bf16.mxu0 0
        %1128 = vmatmul.mubr.bf16.gmra.mrb[0].mxu0 %v696
        %v1129 = vpop.f32.mrb[0].mxu0
        %v1130 = vadd.f32 %v969, %v1129
        %v1131 = vpop.f32.mrb[0].mxu0
        %v1132 = vpop.f32.mrb[0].mxu0
        %v1133 = vadd.f32 %v972, %v1132
        %v1134 = vpop.f32.mrb[0].mxu0
        %1135 = vmatprep.mubr.bf16.mxu0 0
        %1136 = vmatmul.mubr.bf16.gmra.mrb[0].mxu0 %v699
        %v1137 = vpop.f32.mrb[0].mxu0
        %v1138 = vadd.f32 %v977, %v1137
        %v1139 = vpop.f32.mrb[0].mxu0
        %v1140 = vpop.f32.mrb[0].mxu0
        %v1141 = vadd.f32 %v980, %v1140
        %v1142 = vpop.f32.mrb[0].mxu0
        %1143 = vmatprep.mubr.bf16.mxu0 0
        %1144 = vmatmul.mubr.bf16.gmra.mrb[0].mxu0 %v702
        %v1145 = vpop.f32.mrb[0].mxu0
        %v1146 = vadd.f32 %v985, %v1145
        %v1147 = vpop.f32.mrb[0].mxu0
        %v1148 = vpop.f32.mrb[0].mxu0
        %v1149 = vadd.f32 %v988, %v1148
        %v1150 = vpop.f32.mrb[0].mxu0
        %1151 = vmatprep.mubr.bf16.mxu0 0
        %1152 = vmatmul.mubr.bf16.gmra.mrb[0].mxu0 %v705
        %v1153 = vpop.f32.mrb[0].mxu0
        %v1154 = vadd.f32 %v993, %v1153
        %v1155 = vpop.f32.mrb[0].mxu0
        %v1156 = vpop.f32.mrb[0].mxu0
        %v1157 = vadd.f32 %v996, %v1156
        %v1158 = vpop.f32.mrb[0].mxu0
        %1159 = vmatprep.mubr.bf16.mxu0 0
        %1160 = vmatmul.mubr.bf16.gmra.mrb[0].mxu0 %v708
        %v1161 = vpop.f32.mrb[0].mxu0
        %v1162 = vadd.f32 %v1001, %v1161
        %v1163 = vpop.f32.mrb[0].mxu0
        %v1164 = vpop.f32.mrb[0].mxu0
        %v1165 = vadd.f32 %v1004, %v1164
        %v1166 = vpop.f32.mrb[0].mxu0
        %1167 = vmatprep.mubr.bf16.mxu0 0
        %1168 = vmatmul.mubr.bf16.gmra.mrb[0].mxu0 %v711
        %v1169 = vpop.f32.mrb[0].mxu0
        %v1170 = vadd.f32 %v1009, %v1169
        %v1171 = vpop.f32.mrb[0].mxu0
        %v1172 = vpop.f32.mrb[0].mxu0
        %v1173 = vadd.f32 %v1012, %v1172
        %v1174 = vpop.f32.mrb[0].mxu0
        %1175 = vmatprep.mubr.bf16.mxu0 0
        %1176 = vmatmul.mubr.bf16.gmra.mrb[0].mxu0 %v714
        %v1177 = vpop.f32.mrb[0].mxu0
        %v1178 = vadd.f32 %v1017, %v1177
        %v1179 = vpop.f32.mrb[0].mxu0
        %v1180 = vpop.f32.mrb[0].mxu0
        %v1181 = vadd.f32 %v1020, %v1180
        %v1182 = vpop.f32.mrb[0].mxu0
        %1183 = vmatprep.mubr.bf16.mxu0 0
        %1184 = vmatmul.mubr.bf16.gmra.mrb[0].mxu0 %v717
        %v1185 = vpop.f32.mrb[0].mxu0
        %v1186 = vadd.f32 %v1025, %v1185
        %v1187 = vpop.f32.mrb[0].mxu0
        %v1188 = vpop.f32.mrb[0].mxu0
        %v1189 = vadd.f32 %v1028, %v1188
        %v1190 = vpop.f32.mrb[0].mxu0
        %1191 = vmatprep.mubr.bf16.mxu0 0
        %1192 = vmatmul.mubr.bf16.gmra.mrb[0].mxu0 %v720
        %v1193 = vpop.f32.mrb[0].mxu0
        %v1194 = vadd.f32 %v1033, %v1193
        %v1195 = vpop.f32.mrb[0].mxu0
        %v1196 = vpop.f32.mrb[0].mxu0
        %v1197 = vadd.f32 %v1036, %v1196
        %v1198 = vpop.f32.mrb[0].mxu0
        %1199 = vmatprep.mubr.bf16.mxu0 0
        %1200 = vmatmul.mubr.bf16.gmra.mrb[0].mxu0 %v723
        %v1201 = vpop.f32.mrb[0].mxu0
        %v1202 = vadd.f32 %v1041, %v1201
        %v1203 = vpop.f32.mrb[0].mxu0
        %v1204 = vpop.f32.mrb[0].mxu0
        %v1205 = vadd.f32 %v1044, %v1204
        %v1206 = vpop.f32.mrb[0].mxu0
        %1207 = vmatprep.mubr.bf16.mxu0 0
        %1208 = vmatmul.mubr.bf16.gmra.mrb[0].mxu0 %v726
        %v1209 = vpop.f32.mrb[0].mxu0
        %v1210 = vadd.f32 %v1049, %v1209
        %v1211 = vpop.f32.mrb[0].mxu0
        %v1212 = vpop.f32.mrb[0].mxu0
        %v1213 = vadd.f32 %v1052, %v1212
        %v1214 = vpop.f32.mrb[0].mxu0
        %1215 = vmatprep.mubr.bf16.mxu0 0
        %1216 = vmatmul.mubr.bf16.gmra.mrb[0].mxu0 %v729
        %v1217 = vpop.f32.mrb[0].mxu0
        %v1218 = vadd.f32 %v1057, %v1217
        %v1219 = vpop.f32.mrb[0].mxu0
        %v1220 = vpop.f32.mrb[0].mxu0
        %v1221 = vadd.f32 %v1060, %v1220
        %v1222 = vpop.f32.mrb[0].mxu0
        %1223 = vmatprep.mubr.bf16.mxu0 0
        %1224 = vmatmul.mubr.bf16.gmra.mrb[0].mxu0 %v732
        %v1225 = vpop.f32.mrb[0].mxu0
        %v1226 = vadd.f32 %v1065, %v1225
        %v1227 = vpop.f32.mrb[0].mxu0
        %v1228 = vpop.f32.mrb[0].mxu0
        %v1229 = vadd.f32 %v1068, %v1228
        %v1230 = vpop.f32.mrb[0].mxu0
        %1231 = vmatprep.mubr.bf16.mxu0 0
        %1232 = vmatmul.mubr.bf16.gmra.mrb[0].mxu0 %v735
        %v1233 = vpop.f32.mrb[0].mxu0
        %v1234 = vadd.f32 %v1073, %v1233
        %v1235 = vpop.f32.mrb[0].mxu0
        %v1236 = vpop.f32.mrb[0].mxu0
        %v1237 = vadd.f32 %v1076, %v1236
        %v1238 = vpop.f32.mrb[0].mxu0
        %1239 = vmatprep.mubr.bf16.mxu0 0
        %1240 = vmatmul.mubr.bf16.gmra.mrb[0].mxu0 %v738
        %v1241 = vpop.f32.mrb[0].mxu0
        %v1242 = vadd.f32 %v1081, %v1241
        %v1243 = vpop.f32.mrb[0].mxu0
        %v1244 = vpop.f32.mrb[0].mxu0
        %v1245 = vadd.f32 %v1084, %v1244
        %v1246 = vpop.f32.mrb[0].mxu0
        %1247 = vmatprep.mubr.bf16.mxu0 0
        %1248 = vmatmul.mubr.bf16.gmra.mrb[0].mxu0 %v741
        %v1249 = vpop.f32.mrb[0].mxu0
        %v1250 = vadd.f32 %v1089, %v1249
        %v1251 = vpop.f32.mrb[0].mxu0
        %v1252 = vpop.f32.mrb[0].mxu0
        %v1253 = vadd.f32 %v1092, %v1252
        %v1254 = vpop.f32.mrb[0].mxu0
        %1255 = vdwg.mxu0
        %1256 = vst [vmem:[%s137] sm:$0xff] %v1130
        %1257 = vst [vmem:[%s137 + $0x8] sm:$0xff] %v1133
        %1258 = vst [vmem:[%s137 + $0x10] sm:$0xff] %v1138
        %1259 = vst [vmem:[%s137 + $0x18] sm:$0xff] %v1141
        %1260 = vst [vmem:[%s137 + $0x20] sm:$0xff] %v1146
        %1261 = vst [vmem:[%s137 + $0x28] sm:$0xff] %v1149
        %1262 = vst [vmem:[%s137 + $0x30] sm:$0xff] %v1154
        %1263 = vst [vmem:[%s137 + $0x38] sm:$0xff] %v1157
        %1264 = vst [vmem:[%s137 + $0x40] sm:$0xff] %v1162
        %1265 = vst [vmem:[%s137 + $0x48] sm:$0xff] %v1165
        %1266 = vst [vmem:[%s137 + $0x50] sm:$0xff] %v1170
        %1267 = vst [vmem:[%s137 + $0x58] sm:$0xff] %v1173
        %1268 = vst [vmem:[%s137 + $0x60] sm:$0xff] %v1178
        %1269 = vst [vmem:[%s137 + $0x68] sm:$0xff] %v1181
        %1270 = vst [vmem:[%s137 + $0x70] sm:$0xff] %v1186
        %1271 = vst [vmem:[%s137 + $0x78] sm:$0xff] %v1189
        %1272 = vst [vmem:[%s137 + $0x80] sm:$0xff] %v1194
        %1273 = vst [vmem:[%s137 + $0x88] sm:$0xff] %v1197
        %1274 = vst [vmem:[%s137 + $0x90] sm:$0xff] %v1202
        %1275 = vst [vmem:[%s137 + $0x98] sm:$0xff] %v1205
        %1276 = vst [vmem:[%s137 + $0xa0] sm:$0xff] %v1210
        %1277 = vst [vmem:[%s137 + $0xa8] sm:$0xff] %v1213
        %1278 = vst [vmem:[%s137 + $0xb0] sm:$0xff] %v1218
        %1279 = vst [vmem:[%s137 + $0xb8] sm:$0xff] %v1221
        %1280 = vst [vmem:[%s137 + $0xc0] sm:$0xff] %v1226
        %1281 = vst [vmem:[%s137 + $0xc8] sm:$0xff] %v1229
        %1282 = vst [vmem:[%s137 + $0xd0] sm:$0xff] %v1234
        %1283 = vst [vmem:[%s137 + $0xd8] sm:$0xff] %v1237
        %1284 = vst [vmem:[%s137 + $0xe0] sm:$0xff] %v1242
        %1285 = vst [vmem:[%s137 + $0xe8] sm:$0xff] %v1245
        %1286 = vst [vmem:[%s137 + $0xf0] sm:$0xff] %v1250
        %1287 = vst [vmem:[%s137 + $0xf8] sm:$0xff] %v1253
        %s1288 = sand.u32 %s71, 1
        %s1289 = scalar_lea.sflag [#allocation3], %s1288
        %s1290 = sand.u32 %s71, 1
        %s1291 = smul.addr %s1290, 256
        %s1292 = scalar_lea.vmem [#allocation2], %s1291
        // Predicated region
        $region29: #{adaptive_embedding.1} parent=27 // pred_check
          %p1293 = pneg %p81
        $region30: #{adaptive_embedding.1} parent=27 // pred_check_branch
          %1295 = sbr.rel (%p1293) target = $region32
        $region31: #{adaptive_embedding.1} parent=27 // pred_region
          %s1296 = smul.u32 32, %s16
          %s1298 = ssub.s32 4096, 4096
          %1299 = vsyncadd %s1289, %s1298
          %s1300 = smul.addr %s1296, 128
          %s1301 = scalar_lea.hbm %s2, %s1300
          %s1302 = sshll.u32 %s1292, 4
          %s1303 = int_to_ptr.vmem [resolvable:$true] %s1302
          %1308 = dma.vmem_to_hbm [thread:$0]  %s1303, 4096, %s1301, %s1289, 128, 128, 8
        $region32: #{adaptive_embedding.1} parent=27 // pred_fallthru
          _
      $region28: #{adaptive_embedding.1} parent=5 // pred_fallthru
        _
      %p1309 = scmp.le.s32.totalorder 2, %s11
      // Predicated region
      $region33: #{adaptive_embedding.1} parent=5 // pred_check
        %p1310 = pneg %p1309
      $region34: #{adaptive_embedding.1} parent=5 // pred_check_branch
        %1312 = sbr.rel (%p1310) target = $region36
      $region35: #{adaptive_embedding.1} parent=5 // pred_region
        %s1313 = ssub.s32 %s11, 2
        // Predicated region
        $region37: #{adaptive_embedding.1} parent=35 // pred_check
          %p1314 = pneg %p87
        $region38: #{adaptive_embedding.1} parent=35 // pred_check_branch
          %1316 = sbr.rel (%p1314) target = $region40
        $region39: #{adaptive_embedding.1} parent=35 // pred_region
          %s1317 = sand.u32 %s72, 1
          %s1318 = scalar_lea.sflag [#allocation3], %s1317
          %s1319 = sand.u32 %s72, 1
          %s1320 = smul.addr %s1319, 256
          %s1321 = scalar_lea.vmem [#allocation2], %s1320
          %1322 = dma.done %s1318, 4096
        $region40: #{adaptive_embedding.1} parent=35 // pred_fallthru
          _
      $region36: #{adaptive_embedding.1} parent=5 // pred_fallthru
        _
    $region6: #{adaptive_embedding.1} parent=1 // loop_footer
      %s15 = sadd.s32 1, %s11
    $region7: #{adaptive_embedding.1} parent=1 // loop_footer_branch
      %10 = sbr.rel target = $region3
    $region8: #{adaptive_embedding.1} parent=1 // loop_exit
      _
    %1323 = vsyncpa [#allocation3], 1
    %s1324 = scalar_lea.sflag [#allocation3], 1
    %1325 = vsyncpa %s1324, 1

</llo_original>
